<compile_context>
chip_gen: v5e
topology: v5e:2x2
jax: 0.10.0
libtpu: 0.0.40
codegen_flags: <defaults>
</compile_context>

<pallas_src>
import jax
import jax.numpy as jnp
from jax.experimental import pallas as pl
from jax.experimental.pallas import tpu as pltpu


def _round_up(x, m):
    return (x + m - 1) // m * m


def _sublane_multiple(dtype):
    # Packed dtypes tile sublanes in pairs/quads: f32 -> 8, bf16 -> 16, int8/fp8 -> 32.
    return max(8, 32 // jnp.dtype(dtype).itemsize)


def _vmem_capacity_bytes():
    try:
        return int(pltpu.get_tpu_info().vmem_capacity_bytes)
    except Exception:
        return 64 * 1024 * 1024  # conservative default: v7x per-TC VMEM


# ---------------------------------------------------------------------------
# Kernel
# ---------------------------------------------------------------------------
def _make_multi_mlp_kernel(num_enc_layers, negative_slope, operand_dtype):
    """Ref order: x_tile, (W_enc_i, b_enc_i) * L, W_heads, b_heads, out_tile."""

    def kernel(*refs):
        x_ref = refs[0]
        idx = 1

        h = x_ref[...]  # operand dtype straight to the MXU (no forced f32 upcast)

        # Encoder: Linear -> LeakyReLU per layer; f32 accumulation + elementwise.
        for _ in range(num_enc_layers):
            w_ref, b_ref = refs[idx], refs[idx + 1]
            idx += 2
            acc = jnp.dot(h, w_ref[...], preferred_element_type=jnp.float32)
            acc = acc + b_ref[...].astype(jnp.float32)
            acc = jnp.where(acc > 0, acc, negative_slope * acc)  # LeakyReLU (f32)
            h = acc.astype(operand_dtype)

        # Fused output heads: one matmul over the concatenated, lane-padded weights.
        w_ref, b_ref, o_ref = refs[idx], refs[idx + 1], refs[idx + 2]
        o = jnp.dot(h, w_ref[...], preferred_element_type=jnp.float32)
        o = o + b_ref[...].astype(jnp.float32)
        o_ref[...] = o.astype(o_ref.dtype)

    return kernel


# ---------------------------------------------------------------------------
# Wrapper
# ---------------------------------------------------------------------------
def multi_mlp_forward(x, enc_params, head_params, negative_slope=0.01,
                      batch_tile=1024, operand_dtype=None, out_dtype=None,
                      return_fused=False):
    """x: [B, input_size]; enc_params/head_params: lists of (W[in,out], b[1,out]).

    Returns a list of per-head outputs [B, out_size_j] (Identity output activation),
    or (fused_slab[B, sum(out_sizes)], offsets, sizes) if return_fused=True.
    """
    B, in_dim = x.shape
    op_dtype = jnp.dtype(operand_dtype) if operand_dtype is not None else jnp.dtype(x.dtype)
    o_dtype = jnp.dtype(out_dtype) if out_dtype is not None else jnp.dtype(x.dtype)
    out_sizes = [int(w.shape[1]) for w, _ in head_params]

    # --- Optional low-precision operand path: cast x and weights (biases stay f32).
    x_c = x.astype(op_dtype)
    enc_params_c = [(w.astype(op_dtype), b) for w, b in enc_params]
    head_params_c = [(w.astype(op_dtype), b) for w, b in head_params]

    # --- Fuse heads: concat along output axis, zero-pad to lane-dense width.
    # TODO(synk): when sum(out_sizes) << 128 and the kernel is writeback-bound,
    # benchmark an unpadded (masked-store) output against this lane-dense slab.
    w_heads = jnp.concatenate([w for w, _ in head_params_c], axis=1)
    b_heads = jnp.concatenate([b for _, b in head_params_c], axis=1)
    out_total = int(w_heads.shape[1])
    out_pad = max(_round_up(out_total, 128), 128)
    if out_pad != out_total:
        w_heads = jnp.pad(w_heads, ((0, 0), (0, out_pad - out_total)))
        b_heads = jnp.pad(b_heads, ((0, 0), (0, out_pad - out_total)))

    # --- Batch tiling (dtype-aware sublane alignment, >=2 grid steps when possible).
    sub = _sublane_multiple(op_dtype)
    b_pad = _round_up(B, sub)
    tb = min(_round_up(batch_tile, sub), b_pad)
    if tb >= b_pad and b_pad >= 2 * sub:
        # Ensure >=2 grid steps so the "parallel" axis shards across v7x's 2 TCs.
        tb = _round_up(b_pad // 2, sub)
    b_padded = _round_up(b_pad, tb)
    x_p = x_c if b_padded == B else jnp.pad(x_c, ((0, b_padded - B), (0, 0)))
    grid = (b_padded // tb,)

    inputs = [x_p]
    for w, b in enc_params_c:
        inputs += [w, b]
    inputs += [w_heads, b_heads]

    kernel = _make_multi_mlp_kernel(len(enc_params), negative_slope, op_dtype)

    # --- VMEM budget (generation-aware).
    vmem_cap = _vmem_capacity_bytes()
    vmem_cap_usable = int(0.78 * vmem_cap)
    param_bytes = sum(int(a.size) * jnp.dtype(a.dtype).itemsize for a in inputs[1:])
    tile_bytes = (tb * in_dim * jnp.dtype(op_dtype).itemsize
                  + tb * out_pad * jnp.dtype(o_dtype).itemsize)
    if param_bytes + 2 * tile_bytes > vmem_cap_usable:
        # TODO(synk): add a feature-dim-tiled fallback (extra grid axis over hidden /
        # out_pad, or pltpu.emit_pipeline over K) for params that don't fit VMEM.
        raise ValueError(
            f"MultiMlp parameters ({param_bytes / 2**20:.1f} MiB) exceed the "
            f"weight-resident VMEM budget ({vmem_cap_usable / 2**20:.0f} MiB)."
        )

    def _run(param_buffers):
        if param_buffers == 1:
            def param_spec(shape):
                return pl.BlockSpec(shape, lambda i: (0, 0),
                                    pipeline_mode=pl.Buffered(1))
        else:
            def param_spec(shape):
                return pl.BlockSpec(shape, lambda i: (0, 0))

        in_specs = [pl.BlockSpec((tb, in_dim), lambda i: (i, 0))]
        for w, b in enc_params_c:
            in_specs += [param_spec(w.shape), param_spec(b.shape)]
        in_specs += [param_spec(w_heads.shape), param_spec(b_heads.shape)]

        need = param_buffers * param_bytes + 2 * tile_bytes + (1 << 20)
        vmem_bytes = int(min(vmem_cap_usable, max(need, 16 * 1024 * 1024)))

        return pl.pallas_call(
            kernel,
            out_shape=jax.ShapeDtypeStruct((b_padded, out_pad), o_dtype),
            grid_spec=pltpu.PrefetchScalarGridSpec(
                num_scalar_prefetch=0,
                grid=grid,
                in_specs=in_specs,
                out_specs=pl.BlockSpec((tb, out_pad), lambda i: (i, 0)),
            ),
            compiler_params=pltpu.CompilerParams(
                dimension_semantics=("parallel",),
                vmem_limit_bytes=vmem_bytes,
            ),
        )(*inputs)

    try:
        # Preferred: single-buffered constant parameters (halves resident VMEM).
        out = _run(param_buffers=1)
    except Exception:
        # Fallback: default double-buffered specs (always supported).
        out = _run(param_buffers=2)

    if return_fused:
        offsets = []
        off = 0
        for sz in out_sizes:
            offsets.append(off)
            off += sz
        return out[:B, :out_total], offsets, out_sizes

    # Slice the lane-padded slab back into per-head outputs (extra HBM pass;
    # use return_fused=True if the consumer can take the fused slab directly).
    results, off = [], 0
    for sz in out_sizes:
        results.append(out[:B, off:off + sz])
        off += sz
    return results


# ---------------------------------------------------------------------------
# Deterministic parameter init (PyTorch nn.Linear-style uniform init)
# ---------------------------------------------------------------------------
def _init_linear(key, fan_in, fan_out, dtype=jnp.float32):
    kw, kb = jax.random.split(key)
    bound = 1.0 / jnp.sqrt(jnp.asarray(fan_in, dtype=jnp.float32))
    w = jax.random.uniform(kw, (fan_in, fan_out), dtype, minval=-bound, maxval=bound)
    b = jax.random.uniform(kb, (1, fan_out), dtype, minval=-bound, maxval=bound)
    return w, b


def make_multi_mlp_params(key, input_size, layer_sizes, output_sizes):
    sizes = [input_size] + list(layer_sizes)
    enc_params, head_params = [], []
    for i in range(len(sizes) - 1):
        key, sub = jax.random.split(key)
        enc_params.append(_init_linear(sub, sizes[i], sizes[i + 1]))
    for out_size in output_sizes:
        key, sub = jax.random.split(key)
        head_params.append(_init_linear(sub, sizes[-1], out_size))
    return enc_params, head_params


# ---------------------------------------------------------------------------
# Plain-JAX reference for validation
# ---------------------------------------------------------------------------
def multi_mlp_reference(x, enc_params, head_params, negative_slope=0.01):
    h = x
    for w, b in enc_params:
        h = h @ w + b
        h = jnp.where(h > 0, h, negative_slope * h)
    return [h @ w + b for w, b in head_params]


if __name__ == "__main__":
    # MultiMlp(input_size=32, layer_sizes=[64, 32], output_sizes=[16, 8])
    batch = 8
    input_size = 32
    layer_sizes = [64, 32]
    output_sizes = [16, 8]

    key = jax.random.PRNGKey(0)
    key, pkey, xkey = jax.random.split(key, 3)

    enc_params, head_params = make_multi_mlp_params(
        pkey, input_size, layer_sizes, output_sizes
    )
    x = jax.random.normal(xkey, (batch, input_size), dtype=jnp.float32)

    refs = multi_mlp_reference(x, enc_params, head_params)

    # f32 path (exact vs reference)
    outs = multi_mlp_forward(x, enc_params, head_params)
    outs = jax.block_until_ready(outs)
    for o, r in zip(outs, refs):
        assert o.shape == r.shape, (o.shape, r.shape)
        assert jnp.allclose(o, r, atol=1e-5, rtol=1e-5), "f32 mismatch vs reference"

    # Opt-in bf16 operand path (halved HBM traffic; loose tolerance vs f32 ref)
    outs_bf16 = multi_mlp_forward(x, enc_params, head_params,
                                  operand_dtype=jnp.bfloat16)
    outs_bf16 = jax.block_until_ready(outs_bf16)
    for o, r in zip(outs_bf16, refs):
        assert o.shape == r.shape, (o.shape, r.shape)
        assert bool(jnp.all(jnp.isfinite(o.astype(jnp.float32))))
        assert jnp.allclose(o.astype(jnp.float32), r, atol=1e-1, rtol=1e-1), \
            "bf16 path diverged from reference"

    print("KERNEL_OK")
</pallas_src>

<mosaic_0001>
module attributes {stable_mosaic.version = 11 : i64} {
  func.func @kernel(%arg0: i32, %arg1: memref<8x32xf32, #tpu.memory_space<vmem>>, %arg2: memref<32x64xf32, #tpu.memory_space<vmem>>, %arg3: memref<1x64xf32, #tpu.memory_space<vmem>>, %arg4: memref<64x32xf32, #tpu.memory_space<vmem>>, %arg5: memref<1x32xf32, #tpu.memory_space<vmem>>, %arg6: memref<32x128xf32, #tpu.memory_space<vmem>>, %arg7: memref<1x128xf32, #tpu.memory_space<vmem>>, %arg8: memref<8x128xf32, #tpu.memory_space<vmem>>) attributes {dimension_semantics = [#tpu.dimension_semantics<parallel>], iteration_bounds = array<i64: 1>, scalar_prefetch = 0 : i64, scratch_operands = 0 : i64, tpu.core_type = #tpu.core_type<tc>, window_params = [{transform_indices = @transform_0, window_bounds = array<i64: 8, 32>}, {pipeline_mode = #tpu.pipeline_mode<synchronous>, transform_indices = @transform_1, window_bounds = array<i64: 32, 64>}, {pipeline_mode = #tpu.pipeline_mode<synchronous>, transform_indices = @transform_2, window_bounds = array<i64: 1, 64>}, {pipeline_mode = #tpu.pipeline_mode<synchronous>, transform_indices = @transform_3, window_bounds = array<i64: 64, 32>}, {pipeline_mode = #tpu.pipeline_mode<synchronous>, transform_indices = @transform_4, window_bounds = array<i64: 1, 32>}, {pipeline_mode = #tpu.pipeline_mode<synchronous>, transform_indices = @transform_5, window_bounds = array<i64: 32, 128>}, {pipeline_mode = #tpu.pipeline_mode<synchronous>, transform_indices = @transform_6, window_bounds = array<i64: 1, 128>}, {transform_indices = @transform_7, window_bounds = array<i64: 8, 128>}]} {
    %c0 = arith.constant 0 : index
    %c0_0 = arith.constant 0 : index
    %0 = vector.load %arg1[%c0, %c0_0] : memref<8x32xf32, #tpu.memory_space<vmem>>, vector<8x32xf32>
    %c0_1 = arith.constant 0 : index
    %c0_2 = arith.constant 0 : index
    %1 = vector.load %arg2[%c0_1, %c0_2] : memref<32x64xf32, #tpu.memory_space<vmem>>, vector<32x64xf32>
    %cst = arith.constant dense<0.000000e+00> : vector<8x64xf32>
    %2 = tpu.matmul %0, %1, %cst {dimension_numbers = #tpu.dot_dimension_numbers<[1], [0], [0], [1], [0, 0, 1, 1], [], []>} : vector<8x32xf32>, vector<32x64xf32>, vector<8x64xf32> -> vector<8x64xf32>
    %c0_3 = arith.constant 0 : index
    %c0_4 = arith.constant 0 : index
    %3 = vector.load %arg3[%c0_3, %c0_4] : memref<1x64xf32, #tpu.memory_space<vmem>>, vector<1x64xf32>
    %4 = vector.broadcast %3 : vector<1x64xf32> to vector<8x64xf32>
    %5 = arith.addf %2, %4 : vector<8x64xf32>
    %cst_5 = arith.constant 0.000000e+00 : f32
    %6 = vector.broadcast %cst_5 : f32 to vector<8x64xf32>
    %7 = arith.cmpf ogt, %5, %6 : vector<8x64xf32>
    %cst_6 = arith.constant 0.00999999977 : f32
    %8 = vector.broadcast %cst_6 : f32 to vector<8x64xf32>
    %9 = arith.mulf %8, %5 : vector<8x64xf32>
    %10 = arith.select %7, %5, %9 : vector<8x64xi1>, vector<8x64xf32>
    %c0_7 = arith.constant 0 : index
    %c0_8 = arith.constant 0 : index
    %11 = vector.load %arg4[%c0_7, %c0_8] : memref<64x32xf32, #tpu.memory_space<vmem>>, vector<64x32xf32>
    %cst_9 = arith.constant dense<0.000000e+00> : vector<8x32xf32>
    %12 = tpu.matmul %10, %11, %cst_9 {dimension_numbers = #tpu.dot_dimension_numbers<[1], [0], [0], [1], [0, 0, 1, 1], [], []>} : vector<8x64xf32>, vector<64x32xf32>, vector<8x32xf32> -> vector<8x32xf32>
    %c0_10 = arith.constant 0 : index
    %c0_11 = arith.constant 0 : index
    %13 = vector.load %arg5[%c0_10, %c0_11] : memref<1x32xf32, #tpu.memory_space<vmem>>, vector<1x32xf32>
    %14 = vector.broadcast %13 : vector<1x32xf32> to vector<8x32xf32>
    %15 = arith.addf %12, %14 : vector<8x32xf32>
    %cst_12 = arith.constant 0.000000e+00 : f32
    %16 = vector.broadcast %cst_12 : f32 to vector<8x32xf32>
    %17 = arith.cmpf ogt, %15, %16 : vector<8x32xf32>
    %cst_13 = arith.constant 0.00999999977 : f32
    %18 = vector.broadcast %cst_13 : f32 to vector<8x32xf32>
    %19 = arith.mulf %18, %15 : vector<8x32xf32>
    %20 = arith.select %17, %15, %19 : vector<8x32xi1>, vector<8x32xf32>
    %c0_14 = arith.constant 0 : index
    %c0_15 = arith.constant 0 : index
    %21 = vector.load %arg6[%c0_14, %c0_15] : memref<32x128xf32, #tpu.memory_space<vmem>>, vector<32x128xf32>
    %cst_16 = arith.constant dense<0.000000e+00> : vector<8x128xf32>
    %22 = tpu.matmul %20, %21, %cst_16 {dimension_numbers = #tpu.dot_dimension_numbers<[1], [0], [0], [1], [0, 0, 1, 1], [], []>} : vector<8x32xf32>, vector<32x128xf32>, vector<8x128xf32> -> vector<8x128xf32>
    %c0_17 = arith.constant 0 : index
    %c0_18 = arith.constant 0 : index
    %23 = vector.load %arg7[%c0_17, %c0_18] : memref<1x128xf32, #tpu.memory_space<vmem>>, vector<1x128xf32>
    %24 = vector.broadcast %23 : vector<1x128xf32> to vector<8x128xf32>
    %25 = arith.addf %22, %24 : vector<8x128xf32>
    %c0_19 = arith.constant 0 : index
    %c0_20 = arith.constant 0 : index
    %26 = vector.load %arg8[%c0_19, %c0_20] : memref<8x128xf32, #tpu.memory_space<vmem>>, vector<8x128xf32>
    tpu.vector_store %arg8[%c0_19, %c0_20], %25 {strides = array<i32>} : memref<8x128xf32, #tpu.memory_space<vmem>>, vector<8x128xf32>,
    return
  }
  func.func @transform_0(%arg0: i32) -> (i32, i32) {
    %c0_i32 = arith.constant 0 : i32
    %c0_i32_0 = arith.constant 0 : i32
    return %arg0, %c0_i32 : i32, i32
  }
  func.func @transform_1(%arg0: i32) -> (i32, i32) {
    %c0_i32 = arith.constant 0 : i32
    %c0_i32_0 = arith.constant 0 : i32
    %c0_i32_1 = arith.constant 0 : i32
    return %c0_i32, %c0_i32_0 : i32, i32
  }
  func.func @transform_2(%arg0: i32) -> (i32, i32) {
    %c0_i32 = arith.constant 0 : i32
    %c0_i32_0 = arith.constant 0 : i32
    %c0_i32_1 = arith.constant 0 : i32
    return %c0_i32, %c0_i32_0 : i32, i32
  }
  func.func @transform_3(%arg0: i32) -> (i32, i32) {
    %c0_i32 = arith.constant 0 : i32
    %c0_i32_0 = arith.constant 0 : i32
    %c0_i32_1 = arith.constant 0 : i32
    return %c0_i32, %c0_i32_0 : i32, i32
  }
  func.func @transform_4(%arg0: i32) -> (i32, i32) {
    %c0_i32 = arith.constant 0 : i32
    %c0_i32_0 = arith.constant 0 : i32
    %c0_i32_1 = arith.constant 0 : i32
    return %c0_i32, %c0_i32_0 : i32, i32
  }
  func.func @transform_5(%arg0: i32) -> (i32, i32) {
    %c0_i32 = arith.constant 0 : i32
    %c0_i32_0 = arith.constant 0 : i32
    %c0_i32_1 = arith.constant 0 : i32
    return %c0_i32, %c0_i32_0 : i32, i32
  }
  func.func @transform_6(%arg0: i32) -> (i32, i32) {
    %c0_i32 = arith.constant 0 : i32
    %c0_i32_0 = arith.constant 0 : i32
    %c0_i32_1 = arith.constant 0 : i32
    return %c0_i32, %c0_i32_0 : i32, i32
  }
  func.func @transform_7(%arg0: i32) -> (i32, i32) {
    %c0_i32 = arith.constant 0 : i32
    %c0_i32_0 = arith.constant 0 : i32
    return %arg0, %c0_i32 : i32, i32
  }
}

module attributes {stable_mosaic.version = 11 : i64} {
  func.func @kernel(%arg0: i32, %arg1: memref<8x32xf32, #tpu.memory_space<vmem>>, %arg2: memref<32x64xf32, #tpu.memory_space<vmem>>, %arg3: memref<1x64xf32, #tpu.memory_space<vmem>>, %arg4: memref<64x32xf32, #tpu.memory_space<vmem>>, %arg5: memref<1x32xf32, #tpu.memory_space<vmem>>, %arg6: memref<32x128xf32, #tpu.memory_space<vmem>>, %arg7: memref<1x128xf32, #tpu.memory_space<vmem>>, %arg8: memref<8x128xf32, #tpu.memory_space<vmem>>) attributes {dimension_semantics = [#tpu.dimension_semantics<parallel>], iteration_bounds = array<i64: 1>, scalar_prefetch = 0 : i64, scratch_operands = 0 : i64, tpu.core_type = #tpu.core_type<tc>, window_params = [{transform_indices = @transform_0, window_bounds = array<i64: 8, 32>}, {pipeline_mode = #tpu.pipeline_mode<synchronous>, transform_indices = @transform_1, window_bounds = array<i64: 32, 64>}, {pipeline_mode = #tpu.pipeline_mode<synchronous>, transform_indices = @transform_2, window_bounds = array<i64: 1, 64>}, {pipeline_mode = #tpu.pipeline_mode<synchronous>, transform_indices = @transform_3, window_bounds = array<i64: 64, 32>}, {pipeline_mode = #tpu.pipeline_mode<synchronous>, transform_indices = @transform_4, window_bounds = array<i64: 1, 32>}, {pipeline_mode = #tpu.pipeline_mode<synchronous>, transform_indices = @transform_5, window_bounds = array<i64: 32, 128>}, {pipeline_mode = #tpu.pipeline_mode<synchronous>, transform_indices = @transform_6, window_bounds = array<i64: 1, 128>}, {transform_indices = @transform_7, window_bounds = array<i64: 8, 128>}]} {
    %c0 = arith.constant 0 : index
    %c0_0 = arith.constant 0 : index
    %0 = vector.load %arg1[%c0, %c0_0] : memref<8x32xf32, #tpu.memory_space<vmem>>, vector<8x32xf32>
    %c0_1 = arith.constant 0 : index
    %c0_2 = arith.constant 0 : index
    %1 = vector.load %arg2[%c0_1, %c0_2] : memref<32x64xf32, #tpu.memory_space<vmem>>, vector<32x64xf32>
    %cst = arith.constant dense<0.000000e+00> : vector<8x64xf32>
    %2 = tpu.matmul %0, %1, %cst {dimension_numbers = #tpu.dot_dimension_numbers<[1], [0], [0], [1], [0, 0, 1, 1], [], []>} : vector<8x32xf32>, vector<32x64xf32>, vector<8x64xf32> -> vector<8x64xf32>
    %c0_3 = arith.constant 0 : index
    %c0_4 = arith.constant 0 : index
    %3 = vector.load %arg3[%c0_3, %c0_4] : memref<1x64xf32, #tpu.memory_space<vmem>>, vector<1x64xf32>
    %4 = vector.broadcast %3 : vector<1x64xf32> to vector<8x64xf32>
    %5 = arith.addf %2, %4 : vector<8x64xf32>
    %cst_5 = arith.constant 0.000000e+00 : f32
    %6 = vector.broadcast %cst_5 : f32 to vector<8x64xf32>
    %7 = arith.cmpf ogt, %5, %6 : vector<8x64xf32>
    %cst_6 = arith.constant 0.00999999977 : f32
    %8 = vector.broadcast %cst_6 : f32 to vector<8x64xf32>
    %9 = arith.mulf %8, %5 : vector<8x64xf32>
    %10 = arith.select %7, %5, %9 : vector<8x64xi1>, vector<8x64xf32>
    %c0_7 = arith.constant 0 : index
    %c0_8 = arith.constant 0 : index
    %11 = vector.load %arg4[%c0_7, %c0_8] : memref<64x32xf32, #tpu.memory_space<vmem>>, vector<64x32xf32>
    %cst_9 = arith.constant dense<0.000000e+00> : vector<8x32xf32>
    %12 = tpu.matmul %10, %11, %cst_9 {dimension_numbers = #tpu.dot_dimension_numbers<[1], [0], [0], [1], [0, 0, 1, 1], [], []>} : vector<8x64xf32>, vector<64x32xf32>, vector<8x32xf32> -> vector<8x32xf32>
    %c0_10 = arith.constant 0 : index
    %c0_11 = arith.constant 0 : index
    %13 = vector.load %arg5[%c0_10, %c0_11] : memref<1x32xf32, #tpu.memory_space<vmem>>, vector<1x32xf32>
    %14 = vector.broadcast %13 : vector<1x32xf32> to vector<8x32xf32>
    %15 = arith.addf %12, %14 : vector<8x32xf32>
    %cst_12 = arith.constant 0.000000e+00 : f32
    %16 = vector.broadcast %cst_12 : f32 to vector<8x32xf32>
    %17 = arith.cmpf ogt, %15, %16 : vector<8x32xf32>
    %cst_13 = arith.constant 0.00999999977 : f32
    %18 = vector.broadcast %cst_13 : f32 to vector<8x32xf32>
    %19 = arith.mulf %18, %15 : vector<8x32xf32>
    %20 = arith.select %17, %15, %19 : vector<8x32xi1>, vector<8x32xf32>
    %c0_14 = arith.constant 0 : index
    %c0_15 = arith.constant 0 : index
    %21 = vector.load %arg6[%c0_14, %c0_15] : memref<32x128xf32, #tpu.memory_space<vmem>>, vector<32x128xf32>
    %cst_16 = arith.constant dense<0.000000e+00> : vector<8x128xf32>
    %22 = tpu.matmul %20, %21, %cst_16 {dimension_numbers = #tpu.dot_dimension_numbers<[1], [0], [0], [1], [0, 0, 1, 1], [], []>} : vector<8x32xf32>, vector<32x128xf32>, vector<8x128xf32> -> vector<8x128xf32>
    %c0_17 = arith.constant 0 : index
    %c0_18 = arith.constant 0 : index
    %23 = vector.load %arg7[%c0_17, %c0_18] : memref<1x128xf32, #tpu.memory_space<vmem>>, vector<1x128xf32>
    %24 = vector.broadcast %23 : vector<1x128xf32> to vector<8x128xf32>
    %25 = arith.addf %22, %24 : vector<8x128xf32>
    %c0_19 = arith.constant 0 : index
    %c0_20 = arith.constant 0 : index
    %26 = vector.load %arg8[%c0_19, %c0_20] : memref<8x128xf32, #tpu.memory_space<vmem>>, vector<8x128xf32>
    tpu.vector_store %arg8[%c0_19, %c0_20], %25 {strides = array<i32>} : memref<8x128xf32, #tpu.memory_space<vmem>>, vector<8x128xf32>,
    return
  }
  func.func @transform_0(%arg0: i32) -> (i32, i32) {
    %c0_i32 = arith.constant 0 : i32
    %c0_i32_0 = arith.constant 0 : i32
    return %arg0, %c0_i32 : i32, i32
  }
  func.func @transform_1(%arg0: i32) -> (i32, i32) {
    %c0_i32 = arith.constant 0 : i32
    %c0_i32_0 = arith.constant 0 : i32
    %c0_i32_1 = arith.constant 0 : i32
    return %c0_i32, %c0_i32_0 : i32, i32
  }
  func.func @transform_2(%arg0: i32) -> (i32, i32) {
    %c0_i32 = arith.constant 0 : i32
    %c0_i32_0 = arith.constant 0 : i32
    %c0_i32_1 = arith.constant 0 : i32
    return %c0_i32, %c0_i32_0 : i32, i32
  }
  func.func @transform_3(%arg0: i32) -> (i32, i32) {
    %c0_i32 = arith.constant 0 : i32
    %c0_i32_0 = arith.constant 0 : i32
    %c0_i32_1 = arith.constant 0 : i32
    return %c0_i32, %c0_i32_0 : i32, i32
  }
  func.func @transform_4(%arg0: i32) -> (i32, i32) {
    %c0_i32 = arith.constant 0 : i32
    %c0_i32_0 = arith.constant 0 : i32
    %c0_i32_1 = arith.constant 0 : i32
    return %c0_i32, %c0_i32_0 : i32, i32
  }
  func.func @transform_5(%arg0: i32) -> (i32, i32) {
    %c0_i32 = arith.constant 0 : i32
    %c0_i32_0 = arith.constant 0 : i32
    %c0_i32_1 = arith.constant 0 : i32
    return %c0_i32, %c0_i32_0 : i32, i32
  }
  func.func @transform_6(%arg0: i32) -> (i32, i32) {
    %c0_i32 = arith.constant 0 : i32
    %c0_i32_0 = arith.constant 0 : i32
    %c0_i32_1 = arith.constant 0 : i32
    return %c0_i32, %c0_i32_0 : i32, i32
  }
  func.func @transform_7(%arg0: i32) -> (i32, i32) {
    %c0_i32 = arith.constant 0 : i32
    %c0_i32_0 = arith.constant 0 : i32
    return %arg0, %c0_i32 : i32, i32
  }
}

</mosaic_0001>

<llo_original>
// kernel: tpu_custom_call.1
$region0: #{tpu_custom_call.1}
  #allocation0 [shape = 'u32[]', space=smem, size = 0x4, offset = 0x4, fixed_abs, tag = 'smem constant byte address 0x4 - core index']
  #allocation1 [shape = 'u32[72,128]{1,0:T(1,128)}', space=vmem, size = 0x9000, scoped, tag = 'internal scratch']
  %s0 = inlined_call_operand.vmem [shape: f32[8,32], index: 0, kind: input, shape index: {}]
  %s1 = inlined_call_operand.vmem [shape: f32[32,64], index: 1, kind: input, shape index: {}]
  %s2 = inlined_call_operand.vmem [shape: f32[1,64], index: 2, kind: input, shape index: {}]
  %s3 = inlined_call_operand.vmem [shape: f32[64,32], index: 3, kind: input, shape index: {}]
  %s4 = inlined_call_operand.vmem [shape: f32[1,32], index: 4, kind: input, shape index: {}]
  %s5 = inlined_call_operand.vmem [shape: f32[32,128], index: 5, kind: input, shape index: {}]
  %s6 = inlined_call_operand.vmem [shape: f32[1,128], index: 6, kind: input, shape index: {}]
  %s7 = inlined_call_operand.hbm [shape: f32[8,128], index: 7, kind: output, shape index: {}]
  %s8 = sld [smem:[#allocation0]]
  $region38: #{tpu_custom_call.1} parent=0
    _
  %s10 = ssub.s32 1, %s8
  %s11 = scalar_select 0, %s10, %s8
  $region1: #{tpu_custom_call.1} parent=0
    #allocation2 [shape = 'u8[4096]{0}', space=vmem, size = 0x1000, scoped, tag = 'output window, operand 0, single buffered']
    #allocation3 [shape = 's32[1]{0}', space=sflag, size = 0x4, scoped, tag = 'scoped memory for tpu_custom_call.1']
    %12 = vsyncpa [#allocation3], 0
    // Predicated region
    $region2: #{tpu_custom_call.1} parent=1 // pred_check
      _
    $region3: #{tpu_custom_call.1} parent=1 // pred_check_branch
      %14 = sbr.rel (0) target = $region5
    $region4: #{tpu_custom_call.1} parent=1 // pred_region
      _
    $region5: #{tpu_custom_call.1} parent=1 // pred_fallthru
      _
    // Predicated region
    $region6: #{tpu_custom_call.1} parent=1 // pred_check
      _
    $region7: #{tpu_custom_call.1} parent=1 // pred_check_branch
      %16 = sbr.rel (0) target = $region9
    $region8: #{tpu_custom_call.1} parent=1 // pred_region
      _
    $region9: #{tpu_custom_call.1} parent=1 // pred_fallthru
      _
    // Predicated region
    $region10: #{tpu_custom_call.1} parent=1 // pred_check
      _
    $region11: #{tpu_custom_call.1} parent=1 // pred_check_branch
      %18 = sbr.rel (0) target = $region13
    $region12: #{tpu_custom_call.1} parent=1 // pred_region
      _
    $region13: #{tpu_custom_call.1} parent=1 // pred_fallthru
      _
    // Predicated region
    $region14: #{tpu_custom_call.1} parent=1 // pred_check
      _
    $region15: #{tpu_custom_call.1} parent=1 // pred_check_branch
      %20 = sbr.rel (0) target = $region17
    $region16: #{tpu_custom_call.1} parent=1 // pred_region
      _
    $region17: #{tpu_custom_call.1} parent=1 // pred_fallthru
      _
    // Predicated region
    $region18: #{tpu_custom_call.1} parent=1 // pred_check
      _
    $region19: #{tpu_custom_call.1} parent=1 // pred_check_branch
      %22 = sbr.rel (0) target = $region21
    $region20: #{tpu_custom_call.1} parent=1 // pred_region
      _
    $region21: #{tpu_custom_call.1} parent=1 // pred_fallthru
      _
    // Predicated region
    $region22: #{tpu_custom_call.1} parent=1 // pred_check
      _
    $region23: #{tpu_custom_call.1} parent=1 // pred_check_branch
      %24 = sbr.rel (0) target = $region25
    $region24: #{tpu_custom_call.1} parent=1 // pred_region
      _
    $region25: #{tpu_custom_call.1} parent=1 // pred_fallthru
      _
    // Predicated region
    $region26: #{tpu_custom_call.1} parent=1 // pred_check
      _
    $region27: #{tpu_custom_call.1} parent=1 // pred_check_branch
      %26 = sbr.rel (0) target = $region29
    $region28: #{tpu_custom_call.1} parent=1 // pred_region
      _
    $region29: #{tpu_custom_call.1} parent=1 // pred_fallthru
      _
    %v27 = vld [vmem:[%s0] sm:$0xff]
    %v28 = vld [vmem:[%s1] sm:$0xff]
    %v29 = vld [vmem:[%s1 + $0x8] sm:$0xff]
    %v30 = vld [vmem:[%s1 + $0x10] sm:$0xff]
    %v31 = vld [vmem:[%s1 + $0x18] sm:$0xff]
    %v32 = vld [vmem:[%s2] sm:$0x1]
    %v34 = vperm.slane %v32, 0
    %vm36 = vcmask 261120
    %v38 = vsel %vm36, %v27, 0
    %40 = vmatpush.msra.mxu0 0.0
    %41 = vmatpush.msra.mxu0 0.0
    %42 = vmatpush.msra.mxu0 0.0
    %43 = vmatpush.msra.mxu0 0.0
    %44 = vmatpush.msra.mxu0 0.0
    %45 = vmatpush.msra.mxu0 0.0
    %46 = vmatpush.msra.mxu0 0.0
    %47 = vmatpush.msra.mxu0 0.0
    %48 = vmatpush.msra.mxu0 0.0
    %49 = vmatpush.msra.mxu0 0.0
    %50 = vmatpush.msra.mxu0 0.0
    %51 = vmatpush.msra.mxu0 0.0
    %52 = vmatpush.msra.mxu0 %v31
    %53 = vmatpush.msra.mxu0 %v30
    %54 = vmatpush.msra.mxu0 %v29
    %55 = vmatpush.msra.mxu0 %v28
    %56 = vmatmul.f32.gmra.mxu0 %v38
    %v57 = vpop.f32.mrf.mxu0
    %v58 = vadd.f32 %v34, %v57
    %59 = vdwg.mxu0
    %vm60 = vcmp.gt.f32.partialorder %v58, 0.0
    %v61 = vmul.f32 %v58, 0.01
    %v62 = vsel %vm60, %v58, %v61
    %v63 = vld [vmem:[%s3] sm:$0xff]
    %v64 = vld [vmem:[%s3 + $0x8] sm:$0xff]
    %v65 = vld [vmem:[%s3 + $0x10] sm:$0xff]
    %v66 = vld [vmem:[%s3 + $0x18] sm:$0xff]
    %v67 = vld [vmem:[%s3 + $0x20] sm:$0xff]
    %v68 = vld [vmem:[%s3 + $0x28] sm:$0xff]
    %v69 = vld [vmem:[%s3 + $0x30] sm:$0xff]
    %v70 = vld [vmem:[%s3 + $0x38] sm:$0xff]
    %v71 = vld [vmem:[%s4] sm:$0x1]
    %v73 = vperm.slane %v71, 0
    %vm75 = vcmask 523264
    %v77 = vsel %vm75, %v62, 0
    %79 = vmatpush.msra.mxu0 0.0
    %80 = vmatpush.msra.mxu0 0.0
    %81 = vmatpush.msra.mxu0 0.0
    %82 = vmatpush.msra.mxu0 0.0
    %83 = vmatpush.msra.mxu0 0.0
    %84 = vmatpush.msra.mxu0 0.0
    %85 = vmatpush.msra.mxu0 0.0
    %86 = vmatpush.msra.mxu0 0.0
    %87 = vmatpush.msra.mxu0 %v70
    %88 = vmatpush.msra.mxu0 %v69
    %89 = vmatpush.msra.mxu0 %v68
    %90 = vmatpush.msra.mxu0 %v67
    %91 = vmatpush.msra.mxu0 %v66
    %92 = vmatpush.msra.mxu0 %v65
    %93 = vmatpush.msra.mxu0 %v64
    %94 = vmatpush.msra.mxu0 %v63
    %95 = vmatmul.f32.gmra.mxu0 %v77
    %v96 = vpop.f32.mrf.mxu0
    %v97 = vadd.f32 %v73, %v96
    %98 = vdwg.mxu0
    %vm99 = vcmp.gt.f32.partialorder %v97, 0.0
    %v100 = vmul.f32 %v97, 0.01
    %v101 = vsel %vm99, %v97, %v100
    %v102 = vld [vmem:[%s5] sm:$0xff]
    %v103 = vld [vmem:[%s5 + $0x8] sm:$0xff]
    %v104 = vld [vmem:[%s5 + $0x10] sm:$0xff]
    %v105 = vld [vmem:[%s5 + $0x18] sm:$0xff]
    %v106 = vld [vmem:[%s6] sm:$0x1]
    %v108 = vperm.slane %v106, 0
    %v111 = vsel %vm36, %v101, 0
    %113 = vmatpush.msra.mxu0 0.0
    %114 = vmatpush.msra.mxu0 0.0
    %115 = vmatpush.msra.mxu0 0.0
    %116 = vmatpush.msra.mxu0 0.0
    %117 = vmatpush.msra.mxu0 0.0
    %118 = vmatpush.msra.mxu0 0.0
    %119 = vmatpush.msra.mxu0 0.0
    %120 = vmatpush.msra.mxu0 0.0
    %121 = vmatpush.msra.mxu0 0.0
    %122 = vmatpush.msra.mxu0 0.0
    %123 = vmatpush.msra.mxu0 0.0
    %124 = vmatpush.msra.mxu0 0.0
    %125 = vmatpush.msra.mxu0 %v105
    %126 = vmatpush.msra.mxu0 %v104
    %127 = vmatpush.msra.mxu0 %v103
    %128 = vmatpush.msra.mxu0 %v102
    %129 = vmatmul.f32.gmra.mxu0 %v111
    %v130 = vpop.f32.mrf.mxu0
    %v131 = vadd.f32 %v108, %v130
    %132 = vdwg.mxu0
    %133 = vst [vmem:[#allocation2] sm:$0xff] %v131
    // Predicated region
    $region30: #{tpu_custom_call.1} parent=1 // pred_check
      _
    $region31: #{tpu_custom_call.1} parent=1 // pred_check_branch
      %135 = sbr.rel (0) target = $region33
    $region32: #{tpu_custom_call.1} parent=1 // pred_region
      %137 = vsyncadd [#allocation3], 0
      %s139 = sshll.u32 [#allocation2], 4
      %s140 = int_to_ptr.vmem [resolvable:$true] %s139
      %s141 = sshll.u32 %s7, 4
      %s142 = int_to_ptr.hbm [resolvable:$true] %s141
      %144 = dma.vmem_to_hbm [thread:$0]  %s140, 128, %s142, [#allocation3]
    $region33: #{tpu_custom_call.1} parent=1 // pred_fallthru
      _
    // Predicated region
    $region34: #{tpu_custom_call.1} parent=1 // pred_check
      _
    $region35: #{tpu_custom_call.1} parent=1 // pred_check_branch
      %146 = sbr.rel (0) target = $region37
    $region36: #{tpu_custom_call.1} parent=1 // pred_region
      %148 = dma.done [#allocation3], 128
    $region37: #{tpu_custom_call.1} parent=1 // pred_fallthru
      _
    %149 = vsyncpa [#allocation3], 1

// kernel: tpu_custom_call.1
$region0: #{tpu_custom_call.1}
  #allocation0 [shape = 'u32[]', space=smem, size = 0x4, offset = 0x4, fixed_abs, tag = 'smem constant byte address 0x4 - core index']
  #allocation1 [shape = 'u32[72,128]{1,0:T(1,128)}', space=vmem, size = 0x9000, scoped, tag = 'internal scratch']
  %s0 = inlined_call_operand.vmem [shape: f32[8,32], index: 0, kind: input, shape index: {}]
  %s1 = inlined_call_operand.vmem [shape: f32[32,64], index: 1, kind: input, shape index: {}]
  %s2 = inlined_call_operand.vmem [shape: f32[1,64], index: 2, kind: input, shape index: {}]
  %s3 = inlined_call_operand.vmem [shape: f32[64,32], index: 3, kind: input, shape index: {}]
  %s4 = inlined_call_operand.vmem [shape: f32[1,32], index: 4, kind: input, shape index: {}]
  %s5 = inlined_call_operand.vmem [shape: f32[32,128], index: 5, kind: input, shape index: {}]
  %s6 = inlined_call_operand.vmem [shape: f32[1,128], index: 6, kind: input, shape index: {}]
  %s7 = inlined_call_operand.hbm [shape: f32[8,128], index: 7, kind: output, shape index: {}]
  %s8 = sld [smem:[#allocation0]]
  $region38: #{tpu_custom_call.1} parent=0
    _
  %s10 = ssub.s32 1, %s8
  %s11 = scalar_select 0, %s10, %s8
  $region1: #{tpu_custom_call.1} parent=0
    #allocation2 [shape = 'u8[4096]{0}', space=vmem, size = 0x1000, scoped, tag = 'output window, operand 0, single buffered']
    #allocation3 [shape = 's32[1]{0}', space=sflag, size = 0x4, scoped, tag = 'scoped memory for tpu_custom_call.1']
    %12 = vsyncpa [#allocation3], 0
    // Predicated region
    $region2: #{tpu_custom_call.1} parent=1 // pred_check
      _
    $region3: #{tpu_custom_call.1} parent=1 // pred_check_branch
      %14 = sbr.rel (0) target = $region5
    $region4: #{tpu_custom_call.1} parent=1 // pred_region
      _
    $region5: #{tpu_custom_call.1} parent=1 // pred_fallthru
      _
    // Predicated region
    $region6: #{tpu_custom_call.1} parent=1 // pred_check
      _
    $region7: #{tpu_custom_call.1} parent=1 // pred_check_branch
      %16 = sbr.rel (0) target = $region9
    $region8: #{tpu_custom_call.1} parent=1 // pred_region
      _
    $region9: #{tpu_custom_call.1} parent=1 // pred_fallthru
      _
    // Predicated region
    $region10: #{tpu_custom_call.1} parent=1 // pred_check
      _
    $region11: #{tpu_custom_call.1} parent=1 // pred_check_branch
      %18 = sbr.rel (0) target = $region13
    $region12: #{tpu_custom_call.1} parent=1 // pred_region
      _
    $region13: #{tpu_custom_call.1} parent=1 // pred_fallthru
      _
    // Predicated region
    $region14: #{tpu_custom_call.1} parent=1 // pred_check
      _
    $region15: #{tpu_custom_call.1} parent=1 // pred_check_branch
      %20 = sbr.rel (0) target = $region17
    $region16: #{tpu_custom_call.1} parent=1 // pred_region
      _
    $region17: #{tpu_custom_call.1} parent=1 // pred_fallthru
      _
    // Predicated region
    $region18: #{tpu_custom_call.1} parent=1 // pred_check
      _
    $region19: #{tpu_custom_call.1} parent=1 // pred_check_branch
      %22 = sbr.rel (0) target = $region21
    $region20: #{tpu_custom_call.1} parent=1 // pred_region
      _
    $region21: #{tpu_custom_call.1} parent=1 // pred_fallthru
      _
    // Predicated region
    $region22: #{tpu_custom_call.1} parent=1 // pred_check
      _
    $region23: #{tpu_custom_call.1} parent=1 // pred_check_branch
      %24 = sbr.rel (0) target = $region25
    $region24: #{tpu_custom_call.1} parent=1 // pred_region
      _
    $region25: #{tpu_custom_call.1} parent=1 // pred_fallthru
      _
    // Predicated region
    $region26: #{tpu_custom_call.1} parent=1 // pred_check
      _
    $region27: #{tpu_custom_call.1} parent=1 // pred_check_branch
      %26 = sbr.rel (0) target = $region29
    $region28: #{tpu_custom_call.1} parent=1 // pred_region
      _
    $region29: #{tpu_custom_call.1} parent=1 // pred_fallthru
      _
    %v27 = vld [vmem:[%s0] sm:$0xff]
    %v28 = vld [vmem:[%s1] sm:$0xff]
    %v29 = vld [vmem:[%s1 + $0x8] sm:$0xff]
    %v30 = vld [vmem:[%s1 + $0x10] sm:$0xff]
    %v31 = vld [vmem:[%s1 + $0x18] sm:$0xff]
    %v32 = vld [vmem:[%s2] sm:$0x1]
    %v34 = vperm.slane %v32, 0
    %vm36 = vcmask 261120
    %v38 = vsel %vm36, %v27, 0
    %40 = vmatpush.msra.mxu0 0.0
    %41 = vmatpush.msra.mxu0 0.0
    %42 = vmatpush.msra.mxu0 0.0
    %43 = vmatpush.msra.mxu0 0.0
    %44 = vmatpush.msra.mxu0 0.0
    %45 = vmatpush.msra.mxu0 0.0
    %46 = vmatpush.msra.mxu0 0.0
    %47 = vmatpush.msra.mxu0 0.0
    %48 = vmatpush.msra.mxu0 0.0
    %49 = vmatpush.msra.mxu0 0.0
    %50 = vmatpush.msra.mxu0 0.0
    %51 = vmatpush.msra.mxu0 0.0
    %52 = vmatpush.msra.mxu0 %v31
    %53 = vmatpush.msra.mxu0 %v30
    %54 = vmatpush.msra.mxu0 %v29
    %55 = vmatpush.msra.mxu0 %v28
    %56 = vmatmul.f32.gmra.mxu0 %v38
    %v57 = vpop.f32.mrf.mxu0
    %v58 = vadd.f32 %v34, %v57
    %59 = vdwg.mxu0
    %vm60 = vcmp.gt.f32.partialorder %v58, 0.0
    %v61 = vmul.f32 %v58, 0.01
    %v62 = vsel %vm60, %v58, %v61
    %v63 = vld [vmem:[%s3] sm:$0xff]
    %v64 = vld [vmem:[%s3 + $0x8] sm:$0xff]
    %v65 = vld [vmem:[%s3 + $0x10] sm:$0xff]
    %v66 = vld [vmem:[%s3 + $0x18] sm:$0xff]
    %v67 = vld [vmem:[%s3 + $0x20] sm:$0xff]
    %v68 = vld [vmem:[%s3 + $0x28] sm:$0xff]
    %v69 = vld [vmem:[%s3 + $0x30] sm:$0xff]
    %v70 = vld [vmem:[%s3 + $0x38] sm:$0xff]
    %v71 = vld [vmem:[%s4] sm:$0x1]
    %v73 = vperm.slane %v71, 0
    %vm75 = vcmask 523264
    %v77 = vsel %vm75, %v62, 0
    %79 = vmatpush.msra.mxu0 0.0
    %80 = vmatpush.msra.mxu0 0.0
    %81 = vmatpush.msra.mxu0 0.0
    %82 = vmatpush.msra.mxu0 0.0
    %83 = vmatpush.msra.mxu0 0.0
    %84 = vmatpush.msra.mxu0 0.0
    %85 = vmatpush.msra.mxu0 0.0
    %86 = vmatpush.msra.mxu0 0.0
    %87 = vmatpush.msra.mxu0 %v70
    %88 = vmatpush.msra.mxu0 %v69
    %89 = vmatpush.msra.mxu0 %v68
    %90 = vmatpush.msra.mxu0 %v67
    %91 = vmatpush.msra.mxu0 %v66
    %92 = vmatpush.msra.mxu0 %v65
    %93 = vmatpush.msra.mxu0 %v64
    %94 = vmatpush.msra.mxu0 %v63
    %95 = vmatmul.f32.gmra.mxu0 %v77
    %v96 = vpop.f32.mrf.mxu0
    %v97 = vadd.f32 %v73, %v96
    %98 = vdwg.mxu0
    %vm99 = vcmp.gt.f32.partialorder %v97, 0.0
    %v100 = vmul.f32 %v97, 0.01
    %v101 = vsel %vm99, %v97, %v100
    %v102 = vld [vmem:[%s5] sm:$0xff]
    %v103 = vld [vmem:[%s5 + $0x8] sm:$0xff]
    %v104 = vld [vmem:[%s5 + $0x10] sm:$0xff]
    %v105 = vld [vmem:[%s5 + $0x18] sm:$0xff]
    %v106 = vld [vmem:[%s6] sm:$0x1]
    %v108 = vperm.slane %v106, 0
    %v111 = vsel %vm36, %v101, 0
    %113 = vmatpush.msra.mxu0 0.0
    %114 = vmatpush.msra.mxu0 0.0
    %115 = vmatpush.msra.mxu0 0.0
    %116 = vmatpush.msra.mxu0 0.0
    %117 = vmatpush.msra.mxu0 0.0
    %118 = vmatpush.msra.mxu0 0.0
    %119 = vmatpush.msra.mxu0 0.0
    %120 = vmatpush.msra.mxu0 0.0
    %121 = vmatpush.msra.mxu0 0.0
    %122 = vmatpush.msra.mxu0 0.0
    %123 = vmatpush.msra.mxu0 0.0
    %124 = vmatpush.msra.mxu0 0.0
    %125 = vmatpush.msra.mxu0 %v105
    %126 = vmatpush.msra.mxu0 %v104
    %127 = vmatpush.msra.mxu0 %v103
    %128 = vmatpush.msra.mxu0 %v102
    %129 = vmatmul.f32.gmra.mxu0 %v111
    %v130 = vpop.f32.mrf.mxu0
    %v131 = vadd.f32 %v108, %v130
    %132 = vdwg.mxu0
    %133 = vst [vmem:[#allocation2] sm:$0xff] %v131
    // Predicated region
    $region30: #{tpu_custom_call.1} parent=1 // pred_check
      _
    $region31: #{tpu_custom_call.1} parent=1 // pred_check_branch
      %135 = sbr.rel (0) target = $region33
    $region32: #{tpu_custom_call.1} parent=1 // pred_region
      %137 = vsyncadd [#allocation3], 0
      %s139 = sshll.u32 [#allocation2], 4
      %s140 = int_to_ptr.vmem [resolvable:$true] %s139
      %s141 = sshll.u32 %s7, 4
      %s142 = int_to_ptr.hbm [resolvable:$true] %s141
      %144 = dma.vmem_to_hbm [thread:$0]  %s140, 128, %s142, [#allocation3]
    $region33: #{tpu_custom_call.1} parent=1 // pred_fallthru
      _
    // Predicated region
    $region34: #{tpu_custom_call.1} parent=1 // pred_check
      _
    $region35: #{tpu_custom_call.1} parent=1 // pred_check_branch
      %146 = sbr.rel (0) target = $region37
    $region36: #{tpu_custom_call.1} parent=1 // pred_region
      %148 = dma.done [#allocation3], 128
    $region37: #{tpu_custom_call.1} parent=1 // pred_fallthru
      _
    %149 = vsyncpa [#allocation3], 1

</llo_original>
